<compile_context>
chip_gen: v5e
topology: v5e:2x2
jax: 0.10.0
libtpu: 0.0.40
codegen_flags: <defaults>
</compile_context>

<pallas_src>
import jax
import jax.numpy as jnp
from jax.experimental import pallas as pl
from jax.experimental.pallas import tpu as pltpu


DMA_RING_DEPTH = 8  # in-flight row DMAs per grid step


def word_embeddings_forward(input_ids, table):
    """Reproduces CompiledWordEmbeddingsLayer.forward.

    input_ids: int [1, seq] (any leading shape is flattened)
    table    : [vocab, hidden] embedding weights (f32 / bf16 / int8)
    returns  : [1, seq, hidden] with table's dtype
    """
    vocab, hidden = table.shape
    ids_flat = input_ids.reshape(-1).astype(jnp.int32)
    seq = int(ids_flat.shape[0])

    # Clamp so an out-of-range token can never cause an OOB row DMA.
    ids_flat = jnp.clip(ids_flat, 0, vocab - 1)

    # Lane-dense hidden: pad the table's last dim once to a multiple of 128.
    hidden_pad = ((hidden + 127) // 128) * 128
    if hidden_pad != hidden:
        table = jnp.pad(table, ((0, 0), (0, hidden_pad - hidden)))

    # Dtype-aware rows-per-step: multiple of the sublane packing, large enough
    # to amortize the ~0.35 us per-step pipeline overhead, capped so the
    # double-buffered output block stays well under scoped VMEM (v7x: 64 MiB).
    itemsize = jnp.dtype(table.dtype).itemsize
    packing = (4 // itemsize) * 8          # 8 rows f32, 16 bf16, 32 int8
    r = 128
    vmem_budget = 8 * 1024 * 1024          # per double-buffered output block
    while r > packing and 2 * r * hidden_pad * itemsize > vmem_budget:
        r //= 2
    r = max(packing, (r // packing) * packing)

    seq_pad = ((seq + r - 1) // r) * r
    ids_padded = jnp.pad(ids_flat, (0, seq_pad - seq))  # pad ids are never fetched
    n_blocks = seq_pad // r
    depth = DMA_RING_DEPTH

    def gather_kernel(ids_ref, table_hbm, out_ref, sems):
        # ids_ref   : SMEM int32[seq_pad]          (scalar prefetch)
        # table_hbm : HBM  [vocab, hidden_pad]     (memory_space=pl.ANY, no auto-DMA)
        # out_ref   : VMEM (r, hidden_pad)         (pipelined output tile)
        # sems      : DMA semaphores, shape (depth,)
        i = pl.program_id(0)
        base = i * r
        nvalid = jnp.minimum(r, seq - base)        # valid tokens in this block

        def row_copy(j, slot):
            # Gather table row ids[base+j] straight into output row j.
            return pltpu.make_async_copy(
                table_hbm.at[pl.ds(ids_ref[base + j], 1), :],
                out_ref.at[pl.ds(j, 1), :],
                sems.at[slot],
            )

        # Prime the ring with the first min(depth, nvalid) row DMAs.
        @pl.loop(0, jnp.minimum(depth, nvalid))
        def _(j):
            row_copy(j, j).start()

        # Steady state: wait the oldest in-flight row, start the next one.
        @pl.loop(0, nvalid)
        def _(j):
            slot = j & (depth - 1)
            # Wait on this slot's semaphore; same-shaped placeholder refs are
            # fine (only the byte count / semaphore matter for wait()).
            pltpu.make_async_copy(
                table_hbm.at[pl.ds(0, 1), :],
                out_ref.at[pl.ds(j, 1), :],
                sems.at[slot],
            ).wait()

            nxt = j + depth

            @pl.when(nxt < nvalid)
            def _():
                row_copy(nxt, slot).start()

        # Rows [nvalid, r) of the last block are never written; they are sliced
        # off in the wrapper, so no zero-fill (and no vector stores) is needed.

    grid_spec = pltpu.PrefetchScalarGridSpec(
        num_scalar_prefetch=1,
        grid=(n_blocks,),
        in_specs=[pl.BlockSpec(memory_space=pl.ANY)],       # table stays in HBM
        out_specs=pl.BlockSpec((r, hidden_pad), lambda i, ids: (i, 0)),
        scratch_shapes=[pltpu.SemaphoreType.DMA((depth,))],
    )

    out_2d = pl.pallas_call(
        gather_kernel,
        out_shape=jax.ShapeDtypeStruct((seq_pad, hidden_pad), table.dtype),
        grid_spec=grid_spec,
        compiler_params=pltpu.CompilerParams(
            dimension_semantics=("parallel",),  # independent output blocks
        ),
    )(ids_padded, table)

    # Matches: new_input_ids.reshape([1, shape[0], shape[1]])
    return out_2d[:seq, :hidden].reshape(1, seq, hidden)


if __name__ == "__main__":
    key = jax.random.PRNGKey(0)
    k_ids, k_w = jax.random.split(key)

    # Small synthetic shapes consistent with the module's forward.
    # hidden deliberately NOT a multiple of 128 and seq NOT a multiple of the
    # block size, to exercise the lane padding and tail-skip paths.
    vocab, hidden, seq = 64, 48, 13

    # Deterministic synthetic embedding table (no checkpoint load).
    # TODO(synk): the original module wraps an externally compiled (SHARK/IREE)
    # embedding artifact plus numpy<->torch marshalling; only the embedding
    # lookup math itself is reproduced here.
    table = jax.random.normal(k_w, (vocab, hidden), dtype=jnp.float32)
    input_ids = jax.random.randint(k_ids, (1, seq), 0, vocab, dtype=jnp.int32)

    out = word_embeddings_forward(input_ids, table)
    out = jax.block_until_ready(out)

    # Reference check (plain JAX gather + reshape, same semantics).
    ref = jnp.take(table, input_ids.reshape(-1), axis=0).reshape(1, seq, hidden)
    assert out.shape == (1, seq, hidden), out.shape
    assert jnp.allclose(out, ref, atol=1e-6), "mismatch vs reference gather"

    print("KERNEL_OK")
</pallas_src>

<mosaic_0001>
module attributes {stable_mosaic.version = 11 : i64} {
  func.func @gather_kernel(%arg0: i32, %arg1: memref<128xi32, #tpu.memory_space<smem>>, %arg2: memref<64x128xf32, #tpu.memory_space<any>>, %arg3: memref<128x128xf32, #tpu.memory_space<vmem>>, %arg4: memref<8x!tpu.dma_semaphore, #tpu.memory_space<semaphore_mem>>) attributes {dimension_semantics = [#tpu.dimension_semantics<parallel>], iteration_bounds = array<i64: 1>, scalar_prefetch = 1 : i64, scratch_operands = 1 : i64, tpu.core_type = #tpu.core_type<tc>, window_params = [{}, {transform_indices = @transform_1, window_bounds = array<i64: 128, 128>}]} {
    %c128_i32 = arith.constant 128 : i32
    %0 = arith.muli %arg0, %c128_i32 : i32
    %c13_i32 = arith.constant 13 : i32
    %1 = arith.subi %c13_i32, %0 : i32
    %c128_i32_0 = arith.constant 128 : i32
    %2 = arith.minsi %c128_i32_0, %1 : i32
    %c8_i32 = arith.constant 8 : i32
    %3 = arith.minsi %c8_i32, %2 : i32
    %c0_i32 = arith.constant 0 : i32
    %4 = arith.subi %3, %c0_i32 : i32
    %c1_i32 = arith.constant 1 : i32
    %c1_i32_1 = arith.constant 1 : i32
    %5 = arith.subi %c1_i32, %c1_i32_1 : i32
    %6 = arith.addi %4, %5 : i32
    %c1_i32_2 = arith.constant 1 : i32
    %7 = arith.divsi %6, %c1_i32_2 : i32
    %c1_i32_3 = arith.constant 1 : i32
    %c0_i32_4 = arith.constant 0 : i32
    %c0_i32_5 = arith.constant 0 : i32
    %8 = arith.subi %7, %c0_i32_5 : i32
    %9 = arith.addi %c0_i32_5, %8 : i32
    %c1_i32_6 = arith.constant 1 : i32
    scf.for %arg5 = %c0_i32_5 to %9 step %c1_i32_6  : i32 {
      %16 = arith.muli %arg5, %c1_i32_3 : i32
      %17 = arith.addi %c0_i32_4, %16 : i32
      %18 = arith.addi %0, %17 : i32
      %19 = arith.index_cast %18 : i32 to index
      %20 = memref.load %arg1[%19] : memref<128xi32, #tpu.memory_space<smem>>
      %c0_i32_15 = arith.constant 0 : i32
      %21 = tpu.memref_slice %arg2[%20, %c0_i32_15] : memref<64x128xf32, #tpu.memory_space<any>> -> memref<1x128xf32, #tpu.memory_space<any>>
      %c0_i32_16 = arith.constant 0 : i32
      %22 = tpu.memref_slice %arg3[%17, %c0_i32_16] : memref<128x128xf32, #tpu.memory_space<vmem>> -> memref<1x128xf32, #tpu.memory_space<vmem>>
      %23 = tpu.memref_slice %arg4[%17] : memref<8x!tpu.dma_semaphore, #tpu.memory_space<semaphore_mem>> -> memref<1x!tpu.dma_semaphore, #tpu.memory_space<semaphore_mem>>
      %24 = tpu.memref_squeeze %23 : memref<1x!tpu.dma_semaphore, #tpu.memory_space<semaphore_mem>> -> memref<!tpu.dma_semaphore, #tpu.memory_space<semaphore_mem>>
      tpu.enqueue_dma source(%21 : memref<1x128xf32, #tpu.memory_space<any>>) target(%22 : memref<1x128xf32, #tpu.memory_space<vmem>>) target_semaphore(%24 : memref<!tpu.dma_semaphore, #tpu.memory_space<semaphore_mem>>)
    }
    %c0_i32_7 = arith.constant 0 : i32
    %10 = arith.subi %2, %c0_i32_7 : i32
    %c1_i32_8 = arith.constant 1 : i32
    %c1_i32_9 = arith.constant 1 : i32
    %11 = arith.subi %c1_i32_8, %c1_i32_9 : i32
    %12 = arith.addi %10, %11 : i32
    %c1_i32_10 = arith.constant 1 : i32
    %13 = arith.divsi %12, %c1_i32_10 : i32
    %c1_i32_11 = arith.constant 1 : i32
    %c0_i32_12 = arith.constant 0 : i32
    %c0_i32_13 = arith.constant 0 : i32
    %14 = arith.subi %13, %c0_i32_13 : i32
    %15 = arith.addi %c0_i32_13, %14 : i32
    %c1_i32_14 = arith.constant 1 : i32
    scf.for %arg5 = %c0_i32_13 to %15 step %c1_i32_14  : i32 {
      %16 = arith.muli %arg5, %c1_i32_11 : i32
      %17 = arith.addi %c0_i32_12, %16 : i32
      %c7_i32 = arith.constant 7 : i32
      %18 = arith.andi %17, %c7_i32 : i32
      %c0_i32_15 = arith.constant 0 : i32
      %c0_i32_16 = arith.constant 0 : i32
      %19 = tpu.memref_slice %arg2[%c0_i32_15, %c0_i32_16] : memref<64x128xf32, #tpu.memory_space<any>> -> memref<1x128xf32, #tpu.memory_space<any>>
      %c0_i32_17 = arith.constant 0 : i32
      %20 = tpu.memref_slice %arg3[%17, %c0_i32_17] : memref<128x128xf32, #tpu.memory_space<vmem>> -> memref<1x128xf32, #tpu.memory_space<vmem>>
      %21 = tpu.memref_slice %arg4[%18] : memref<8x!tpu.dma_semaphore, #tpu.memory_space<semaphore_mem>> -> memref<1x!tpu.dma_semaphore, #tpu.memory_space<semaphore_mem>>
      %22 = tpu.memref_squeeze %21 : memref<1x!tpu.dma_semaphore, #tpu.memory_space<semaphore_mem>> -> memref<!tpu.dma_semaphore, #tpu.memory_space<semaphore_mem>>
      tpu.wait_dma2 semaphore(%22 : memref<!tpu.dma_semaphore, #tpu.memory_space<semaphore_mem>>) src(%19 : memref<1x128xf32, #tpu.memory_space<any>>) dst(%20 : memref<1x128xf32, #tpu.memory_space<vmem>>)
      %c8_i32_18 = arith.constant 8 : i32
      %23 = arith.addi %17, %c8_i32_18 : i32
      %24 = arith.cmpi slt, %23, %2 : i32
      %25 = arith.extui %24 : i1 to i32
      %c0_i32_19 = arith.constant 0 : i32
      %26 = arith.cmpi ne, %25, %c0_i32_19 : i32
      scf.if %26 {
        %27 = arith.addi %0, %23 : i32
        %28 = arith.index_cast %27 : i32 to index
        %29 = memref.load %arg1[%28] : memref<128xi32, #tpu.memory_space<smem>>
        %c0_i32_20 = arith.constant 0 : i32
        %30 = tpu.memref_slice %arg2[%29, %c0_i32_20] : memref<64x128xf32, #tpu.memory_space<any>> -> memref<1x128xf32, #tpu.memory_space<any>>
        %c0_i32_21 = arith.constant 0 : i32
        %31 = tpu.memref_slice %arg3[%23, %c0_i32_21] : memref<128x128xf32, #tpu.memory_space<vmem>> -> memref<1x128xf32, #tpu.memory_space<vmem>>
        %32 = tpu.memref_slice %arg4[%18] : memref<8x!tpu.dma_semaphore, #tpu.memory_space<semaphore_mem>> -> memref<1x!tpu.dma_semaphore, #tpu.memory_space<semaphore_mem>>
        %33 = tpu.memref_squeeze %32 : memref<1x!tpu.dma_semaphore, #tpu.memory_space<semaphore_mem>> -> memref<!tpu.dma_semaphore, #tpu.memory_space<semaphore_mem>>
        tpu.enqueue_dma source(%30 : memref<1x128xf32, #tpu.memory_space<any>>) target(%31 : memref<1x128xf32, #tpu.memory_space<vmem>>) target_semaphore(%33 : memref<!tpu.dma_semaphore, #tpu.memory_space<semaphore_mem>>)
      } else {
      }
    }
    return
  }
  func.func @transform_1(%arg0: i32, %arg1: memref<128xi32, #tpu.memory_space<smem>>) -> (i32, i32) {
    %c0_i32 = arith.constant 0 : i32
    %c0_i32_0 = arith.constant 0 : i32
    return %arg0, %c0_i32 : i32, i32
  }
}

</mosaic_0001>

<llo_original>
// kernel: tpu_custom_call.1
$region0: #{tpu_custom_call.1}
  #allocation0 [shape = 'u32[]', space=smem, size = 0x4, offset = 0x4, fixed_abs, tag = 'smem constant byte address 0x4 - core index']
  #allocation1 [shape = 'u32[72,128]{1,0:T(1,128)}', space=vmem, size = 0x9000, scoped, tag = 'internal scratch']
  #allocation2 [shape = 's32[8]{0}', space=sflag, size = 0x20, scoped, tag = 'scratch operand']
  #allocation3 [shape = 's32[1]{0}', space=sflag, size = 0x4, scoped, tag = 'scoped memory for tpu_custom_call.1']
  #allocation4 [shape = 'u8[512]{0}', space=smem, size = 0x200, scoped, tag = 'prefetched SMEM operand 0']
  #allocation7 [shape = 's32[]', space=sflag, size = 0x4, offset = 0, fixed_abs, tag = 'sflag constant byte address 0x0 - dummy sync flag']
  #allocation8 [shape = 's32[]', space=sflag, size = 0x4, offset = 0, fixed_abs, tag = 'sflag constant byte address 0x0 - dummy sync flag']
  #allocation9 [shape = 'u32[]', space=smem, size = 0x4, offset = 0x44, fixed_abs, tag = 'smem constant byte address 0x44 - assertion arg 0']
  #allocation10 [shape = 'u32[]', space=smem, size = 0x4, offset = 0x48, fixed_abs, tag = 'smem constant byte address 0x48 - assertion arg 1']
  #allocation11 [shape = 's32[]', space=sflag, size = 0x4, offset = 0, fixed_abs, tag = 'sflag constant byte address 0x0 - dummy sync flag']
  #allocation12 [shape = 's32[]', space=sflag, size = 0x4, offset = 0, fixed_abs, tag = 'sflag constant byte address 0x0 - dummy sync flag']
  %s0 = inlined_call_operand.hbm [shape: s32[128], index: 0, kind: input, shape index: {}]
  %s1 = inlined_call_operand.hbm [shape: f32[64,128], index: 1, kind: input, shape index: {}]
  %s2 = inlined_call_operand.hbm [shape: f32[128,128], index: 2, kind: output, shape index: {}]
  %s3 = sld [smem:[#allocation0]]
  $region36: #{tpu_custom_call.1} parent=0
    _
  %s5 = ssub.s32 1, %s3
  %s6 = scalar_select 0, %s5, %s3
  %s8 = sshll.u32 %s0, 4
  %s9 = int_to_ptr.hbm [resolvable:$true] %s8
  %11 = dma.hbm_to_smem %s9, 16, [#allocation4], [#allocation3]
  %13 = dma.done [#allocation3], 16
  %14 = sfence
  $region1: #{tpu_custom_call.1} parent=0
    #allocation5 [shape = 'u8[65536]{0}', space=vmem, size = 0x10000, scoped, tag = 'output window, operand 0, single buffered']
    #allocation6 [shape = 's32[1]{0}', space=sflag, size = 0x4, scoped, tag = 'scoped memory for tpu_custom_call.1']
    %15 = vsyncpa [#allocation6], 0
    %s16 = smul.u32 0, 128
    %s17 = ssub.s32 13, %s16
    %p18 = scmp.lt.s32.totalorder %s17, 128
    %s19 = scalar_select %p18, %s17, 128
    %p20 = scmp.lt.s32.totalorder %s19, 8
    %s21 = scalar_select %p20, %s19, 8
    // While loop
    $region2: #{tpu_custom_call.1} parent=1 // loop_pre_header
      _
    $region3: #{tpu_custom_call.1} parent=1 // loop_header
      %s23 = sphi 0, %s25
      %p24 = scmp.ge.s32.totalorder %s23, %s21
    $region4: #{tpu_custom_call.1} parent=1 // loop_header_branch
      %27 = sbr.rel (%p24) target = $region8
    $region5: #{tpu_custom_call.1} parent=1 // loop_body
      %s28 = sadd.s32 %s16, %s23
      %s29 = sld [smem:[#allocation4 + %s28]]
      %s30 = scalar_lea.hbm %s1, %s29
      %s31 = scalar_lea.vmem [#allocation5], %s23
      %s32 = scalar_lea.sflag [#allocation2], %s23
      // Predicated region
      $region9: #{tpu_custom_call.1} parent=5 // pred_check
        _
      $region10: #{tpu_custom_call.1} parent=5 // pred_check_branch
        %34 = sbr.rel target = $region12
      $region11: #{tpu_custom_call.1} parent=5 // pred_region
        %35 = sst [smem:[#allocation9]] [#allocation8]
        %36 = sst [smem:[#allocation10]] [#allocation7]
      $region12: #{tpu_custom_call.1} parent=5 // pred_fallthru
        _
      %38 = shalt.err (0)
      %s40 = sshll.u32 %s30, 4
      %s41 = int_to_ptr.hbm [resolvable:$true] %s40
      %s42 = sshll.u32 %s31, 4
      %s43 = int_to_ptr.vmem [resolvable:$true] %s42
      %45 = dma.hbm_to_vmem [thread:$0]  %s41, 16, %s43, %s32
    $region6: #{tpu_custom_call.1} parent=1 // loop_footer
      %s25 = sadd.s32 %s23, 1
    $region7: #{tpu_custom_call.1} parent=1 // loop_footer_branch
      %22 = sbr.rel target = $region3
    $region8: #{tpu_custom_call.1} parent=1 // loop_exit
      _
    // While loop
    $region13: #{tpu_custom_call.1} parent=1 // loop_pre_header
      _
    $region14: #{tpu_custom_call.1} parent=1 // loop_header
      %s47 = sphi 0, %s49
      %p48 = scmp.ge.s32.totalorder %s47, %s19
    $region15: #{tpu_custom_call.1} parent=1 // loop_header_branch
      %51 = sbr.rel (%p48) target = $region19
    $region16: #{tpu_custom_call.1} parent=1 // loop_body
      %s52 = sand.u32 %s47, 7
      %s53 = scalar_lea.sflag [#allocation2], %s52
      %s54 = smul.u32 1, 1
      %s55 = sshll.u32 %s54, 4
      %56 = dma.done %s53, %s55
      %s57 = sadd.s32 %s47, 8
      %p58 = scmp.lt.s32.totalorder %s57, %s19
      // Predicated region
      $region20: #{tpu_custom_call.1} parent=16 // pred_check
        %p59 = pneg %p58
      $region21: #{tpu_custom_call.1} parent=16 // pred_check_branch
        %61 = sbr.rel (%p59) target = $region23
      $region22: #{tpu_custom_call.1} parent=16 // pred_region
        %s62 = sadd.s32 %s16, %s57
        %s63 = sld [smem:[#allocation4 + %s62]]
        %s64 = scalar_lea.hbm %s1, %s63
        %s65 = scalar_lea.vmem [#allocation5], %s57
        // Predicated region
        $region24: #{tpu_custom_call.1} parent=22 // pred_check
          _
        $region25: #{tpu_custom_call.1} parent=22 // pred_check_branch
          %67 = sbr.rel target = $region27
        $region26: #{tpu_custom_call.1} parent=22 // pred_region
          %68 = sst [smem:[#allocation9]] [#allocation12]
          %69 = sst [smem:[#allocation10]] [#allocation11]
        $region27: #{tpu_custom_call.1} parent=22 // pred_fallthru
          _
        %71 = shalt.err (0)
        %s73 = sshll.u32 %s64, 4
        %s74 = int_to_ptr.hbm [resolvable:$true] %s73
        %s75 = sshll.u32 %s65, 4
        %s76 = int_to_ptr.vmem [resolvable:$true] %s75
        %78 = dma.hbm_to_vmem [thread:$0]  %s74, 16, %s76, %s53
      $region23: #{tpu_custom_call.1} parent=16 // pred_fallthru
        _
    $region17: #{tpu_custom_call.1} parent=1 // loop_footer
      %s49 = sadd.s32 %s47, 1
    $region18: #{tpu_custom_call.1} parent=1 // loop_footer_branch
      %46 = sbr.rel target = $region14
    $region19: #{tpu_custom_call.1} parent=1 // loop_exit
      _
    // Predicated region
    $region28: #{tpu_custom_call.1} parent=1 // pred_check
      _
    $region29: #{tpu_custom_call.1} parent=1 // pred_check_branch
      %80 = sbr.rel (0) target = $region31
    $region30: #{tpu_custom_call.1} parent=1 // pred_region
      %82 = vsyncadd [#allocation6], 0
      %s83 = sshll.u32 [#allocation5], 4
      %s84 = int_to_ptr.vmem [resolvable:$true] %s83
      %s85 = sshll.u32 %s2, 4
      %s86 = int_to_ptr.hbm [resolvable:$true] %s85
      %91 = dma.vmem_to_hbm [thread:$0]  %s84, 2048, %s86, [#allocation6], 128, 128, 8
    $region31: #{tpu_custom_call.1} parent=1 // pred_fallthru
      _
    // Predicated region
    $region32: #{tpu_custom_call.1} parent=1 // pred_check
      _
    $region33: #{tpu_custom_call.1} parent=1 // pred_check_branch
      %93 = sbr.rel (0) target = $region35
    $region34: #{tpu_custom_call.1} parent=1 // pred_region
      %95 = dma.done [#allocation6], 2048
    $region35: #{tpu_custom_call.1} parent=1 // pred_fallthru
      _
    %96 = vsyncpa [#allocation6], 1
  %97 = vsyncmov [#allocation2]
  %s98 = vpop.sfrf %97
  %p99 = scmp.eq.s32.totalorder %s98, 0
  %p100 = pneg %p99
  %102 = shalt.err (%p100)
  %s103 = scalar_lea.sflag [#allocation2], 1
  %104 = vsyncmov %s103
  %s105 = vpop.sfrf %104
  %p106 = scmp.eq.s32.totalorder %s105, 0
  %p107 = pneg %p106
  %109 = shalt.err (%p107)
  %s110 = scalar_lea.sflag [#allocation2], 2
  %111 = vsyncmov %s110
  %s112 = vpop.sfrf %111
  %p113 = scmp.eq.s32.totalorder %s112, 0
  %p114 = pneg %p113
  %116 = shalt.err (%p114)
  %s117 = scalar_lea.sflag [#allocation2], 3
  %118 = vsyncmov %s117
  %s119 = vpop.sfrf %118
  %p120 = scmp.eq.s32.totalorder %s119, 0
  %p121 = pneg %p120
  %123 = shalt.err (%p121)
  %s124 = scalar_lea.sflag [#allocation2], 4
  %125 = vsyncmov %s124
  %s126 = vpop.sfrf %125
  %p127 = scmp.eq.s32.totalorder %s126, 0
  %p128 = pneg %p127
  %130 = shalt.err (%p128)
  %s131 = scalar_lea.sflag [#allocation2], 5
  %132 = vsyncmov %s131
  %s133 = vpop.sfrf %132
  %p134 = scmp.eq.s32.totalorder %s133, 0
  %p135 = pneg %p134
  %137 = shalt.err (%p135)
  %s138 = scalar_lea.sflag [#allocation2], 6
  %139 = vsyncmov %s138
  %s140 = vpop.sfrf %139
  %p141 = scmp.eq.s32.totalorder %s140, 0
  %p142 = pneg %p141
  %144 = shalt.err (%p142)
  %s145 = scalar_lea.sflag [#allocation2], 7
  %146 = vsyncmov %s145
  %s147 = vpop.sfrf %146
  %p148 = scmp.eq.s32.totalorder %s147, 0
  %p149 = pneg %p148
  %151 = shalt.err (%p149)

</llo_original>
